<compile_context>
chip_gen: v7x
topology: tpu7x:2x2x1
jax: 0.10.0
libtpu: 0.0.40
codegen_flags: <defaults>
</compile_context>

<pallas_src>
import jax
import jax.numpy as jnp
from jax.experimental import pallas as pl
from jax.experimental.pallas import tpu as pltpu


def _round_up(x, m):
    return ((x + m - 1) // m) * m


# ----------------------------------------------------------------------------
# Fused Pallas kernel: enc1(ReLU) -> enc2 -> dec1(ReLU) -> dec2(sigmoid)
# Intermediates live in vregs / compiler-managed VMEM; only (out, code) stored.
# ----------------------------------------------------------------------------
def _autoencoder_kernel(x_ref,
                        ew1_ref, eb1_ref, ew2_ref, eb2_ref,
                        dw1_ref, db1_ref, dw2_ref, db2_ref,
                        out_ref, code_ref):
    # Feed the MXU operands in the weights' native dtype (bf16 weights -> bf16
    # MXU throughput); accumulate in f32 via preferred_element_type.
    mxu_dtype = ew1_ref.dtype
    x = x_ref[...].astype(mxu_dtype)

    # encoder layer 1: Linear + ReLU
    h = jnp.dot(x, ew1_ref[...], preferred_element_type=jnp.float32)
    h = jnp.maximum(h + eb1_ref[...], 0.0)

    # encoder layer 2: Linear -> code (zero-padded code columns stay exactly 0)
    code = jnp.dot(h.astype(mxu_dtype), ew2_ref[...],
                   preferred_element_type=jnp.float32)
    code = code + eb2_ref[...]

    # decoder layer 1: Linear + ReLU (zero-padded code rows contribute nothing)
    h2 = jnp.dot(code.astype(mxu_dtype), dw1_ref[...],
                 preferred_element_type=jnp.float32)
    h2 = jnp.maximum(h2 + db1_ref[...], 0.0)

    # decoder layer 2: Linear + sigmoid (stable form: exp(-|y|) never overflows;
    # exp lands on the EUP slot; exact reciprocal keeps numerics PyTorch-close)
    y = jnp.dot(h2.astype(mxu_dtype), dw2_ref[...],
                preferred_element_type=jnp.float32)
    y = y + db2_ref[...]
    e = jnp.exp(-jnp.abs(y))
    inv = pl.reciprocal(1.0 + e, approx=False)
    sig = jnp.where(y >= 0, inv, e * inv)

    code_ref[...] = code.astype(code_ref.dtype)
    out_ref[...] = sig.astype(out_ref.dtype)


# ----------------------------------------------------------------------------
# Wrapper: one pallas_call for the whole forward pass
# ----------------------------------------------------------------------------
def autoencoder_forward(params, data, epoch, n_epochs, *, batch_tile_cap=1024):
    # TODO(synk): epoch/n_epochs only drive training schedules in the injected
    # encoder of the original; they do not change the deterministic forward.
    del epoch, n_epochs

    B, Din = data.shape
    H = params["enc_w1"].shape[1]
    C = params["enc_w2"].shape[1]
    dtype = data.dtype
    w_dtype = params["enc_w1"].dtype

    # Lane-dense padded feature widths: stored outputs (and matmul N dims) are
    # multiples of 128 so HBM writebacks are unmasked full-lane stores.
    Hp = _round_up(H, 128)
    Cp = _round_up(C, 128)
    Dp = _round_up(Din, 128)

    # dtype-correct sublane multiple for the batch tile (8 f32 / 16 bf16 / 32 i8)
    itemsize = jnp.dtype(dtype).itemsize
    sublane = {4: 8, 2: 16, 1: 32}.get(itemsize, 8)

    # Batch-tile selection: as big as the (tunable) cap allows; prefer a tile
    # that divides the sublane-rounded batch so there is no pad/slice round trip.
    tile_cap = max(sublane, (batch_tile_cap // sublane) * sublane)
    b_rounded = _round_up(B, sublane)
    if b_rounded <= tile_cap:
        tile_b = b_rounded
        # v7x: its 2 TensorCores only share work across >=2 "parallel" grid
        # steps; split big single-tile batches (step overhead is only ~0.35us).
        if b_rounded >= 512 and b_rounded % (2 * sublane) == 0:
            tile_b = b_rounded // 2
    else:
        tile_b = tile_cap
        for t in range(tile_cap, sublane - 1, -sublane):
            if b_rounded % t == 0:
                tile_b = t
                break
    padded_b = _round_up(B, tile_b)

    x = data
    if padded_b != B:
        x = jnp.pad(x, ((0, padded_b - B), (0, 0)))
    grid = (padded_b // tile_b,)

    # Zero-pad weights/biases to the lane-dense shapes (trace-time-small ops;
    # zeros keep padded output columns exact and padded code rows inert).
    def pad2(a, rows, cols):
        r, c = a.shape
        if (r, c) == (rows, cols):
            return a
        return jnp.pad(a, ((0, rows - r), (0, cols - c)))

    ew1 = pad2(params["enc_w1"], Din, Hp)
    ew2 = pad2(params["enc_w2"], Hp, Cp)
    dw1 = pad2(params["dec_w1"], Cp, Hp)
    dw2 = pad2(params["dec_w2"], Hp, Dp)
    eb1 = pad2(params["enc_b1"].astype(jnp.float32).reshape(1, H), 1, Hp)
    eb2 = pad2(params["enc_b2"].astype(jnp.float32).reshape(1, C), 1, Cp)
    db1 = pad2(params["dec_b1"].astype(jnp.float32).reshape(1, H), 1, Hp)
    db2 = pad2(params["dec_b2"].astype(jnp.float32).reshape(1, Din), 1, Dp)

    # VMEM budget: double-buffered in/out tiles + resident weights + f32
    # intermediates + headroom, capped below v7x's 64 MiB per-TC VMEM.
    w_itemsize = jnp.dtype(w_dtype).itemsize
    tile_io = tile_b * (Din + Dp + Cp) * itemsize
    weight_bytes = ((Din * Hp + Hp * Cp + Cp * Hp + Hp * Dp) * w_itemsize
                    + (2 * Hp + Cp + Dp) * 4)
    act_bytes = tile_b * (2 * Hp + Cp + Dp) * 4
    vmem_limit = 2 * (tile_io + weight_bytes) + act_bytes + (4 << 20)
    vmem_limit = int(min(max(vmem_limit, 8 << 20), 48 << 20))

    flops = 2 * padded_b * (Din * Hp + Hp * Cp + Cp * Hp + Hp * Dp)
    transcendentals = padded_b * Dp  # exp in the sigmoid
    bytes_accessed = int(padded_b * Din * itemsize
                         + padded_b * (Dp + Cp) * itemsize
                         + weight_bytes)

    out_p, code_p = pl.pallas_call(
        _autoencoder_kernel,
        out_shape=(
            jax.ShapeDtypeStruct((padded_b, Dp), dtype),
            jax.ShapeDtypeStruct((padded_b, Cp), dtype),
        ),
        grid=grid,
        in_specs=[
            pl.BlockSpec((tile_b, Din), lambda i: (i, 0)),   # data tile
            pl.BlockSpec((Din, Hp), lambda i: (0, 0)),       # enc_w1 (VMEM-resident)
            pl.BlockSpec((1, Hp), lambda i: (0, 0)),         # enc_b1
            pl.BlockSpec((Hp, Cp), lambda i: (0, 0)),        # enc_w2
            pl.BlockSpec((1, Cp), lambda i: (0, 0)),         # enc_b2
            pl.BlockSpec((Cp, Hp), lambda i: (0, 0)),        # dec_w1
            pl.BlockSpec((1, Hp), lambda i: (0, 0)),         # dec_b1
            pl.BlockSpec((Hp, Dp), lambda i: (0, 0)),        # dec_w2
            pl.BlockSpec((1, Dp), lambda i: (0, 0)),         # dec_b2
        ],
        out_specs=(
            pl.BlockSpec((tile_b, Dp), lambda i: (i, 0)),    # reconstruction (lane-dense)
            pl.BlockSpec((tile_b, Cp), lambda i: (i, 0)),    # code (lane-dense)
        ),
        compiler_params=pltpu.CompilerParams(
            dimension_semantics=("parallel",),
            vmem_limit_bytes=vmem_limit,
        ),
        cost_estimate=pl.CostEstimate(
            flops=flops,
            transcendentals=transcendentals,
            bytes_accessed=bytes_accessed,
        ),
    )(x, ew1, eb1, ew2, eb2, dw1, db1, dw2, db2)

    out = out_p[:B, :Din] if (padded_b != B or Dp != Din) else out_p
    code = code_p[:B, :C] if (padded_b != B or Cp != C) else code_p
    return out, code


# ----------------------------------------------------------------------------
# Deterministic parameter init (synthetic; no checkpoint load)
# ----------------------------------------------------------------------------
def init_params(key, in_dim, hidden_dim, code_size, dtype=jnp.float32):
    ks = jax.random.split(key, 8)

    def lin(kw, kb, din, dout):
        scale = 1.0 / (din ** 0.5)
        w = jax.random.uniform(kw, (din, dout), dtype, -scale, scale)
        b = jax.random.uniform(kb, (dout,), dtype, -scale, scale)
        return w, b

    p = {}
    p["enc_w1"], p["enc_b1"] = lin(ks[0], ks[1], in_dim, hidden_dim)
    p["enc_w2"], p["enc_b2"] = lin(ks[2], ks[3], hidden_dim, code_size)
    p["dec_w1"], p["dec_b1"] = lin(ks[4], ks[5], code_size, hidden_dim)
    p["dec_w2"], p["dec_b2"] = lin(ks[6], ks[7], hidden_dim, in_dim)
    return p


if __name__ == "__main__":
    key = jax.random.PRNGKey(0)
    k_param, k_data = jax.random.split(key)

    batch = 8
    in_dim = 64
    hidden_dim = 128
    code_size = 32

    params = init_params(k_param, in_dim, hidden_dim, code_size)
    data = jax.random.uniform(k_data, (batch, in_dim), jnp.float32)

    out, code = autoencoder_forward(params, data, epoch=0, n_epochs=1)
    jax.block_until_ready(out)
    jax.block_until_ready(code)

    # Pure-JAX reference check of the fused Pallas path.
    def ref_linear(x, w, b, act):
        y = x @ w + b
        if act == "relu":
            return jnp.maximum(y, 0.0)
        if act == "sigmoid":
            return jax.nn.sigmoid(y)
        return y

    h = ref_linear(data, params["enc_w1"], params["enc_b1"], "relu")
    code_ref = ref_linear(h, params["enc_w2"], params["enc_b2"], "none")
    h2 = ref_linear(code_ref, params["dec_w1"], params["dec_b1"], "relu")
    out_ref = ref_linear(h2, params["dec_w2"], params["dec_b2"], "sigmoid")

    assert out.shape == (batch, in_dim) and code.shape == (batch, code_size)
    assert jnp.allclose(code, code_ref, atol=1e-5, rtol=1e-5)
    assert jnp.allclose(out, out_ref, atol=1e-4, rtol=1e-4)

    print("KERNEL_OK")
</pallas_src>

<mosaic_0001>
module attributes {stable_mosaic.version = 11 : i64} {
  func.func @_autoencoder_kernel(%arg0: i32, %arg1: memref<8x64xf32, #tpu.memory_space<vmem>>, %arg2: memref<64x128xf32, #tpu.memory_space<vmem>>, %arg3: memref<1x128xf32, #tpu.memory_space<vmem>>, %arg4: memref<128x128xf32, #tpu.memory_space<vmem>>, %arg5: memref<1x128xf32, #tpu.memory_space<vmem>>, %arg6: memref<128x128xf32, #tpu.memory_space<vmem>>, %arg7: memref<1x128xf32, #tpu.memory_space<vmem>>, %arg8: memref<128x128xf32, #tpu.memory_space<vmem>>, %arg9: memref<1x128xf32, #tpu.memory_space<vmem>>, %arg10: memref<8x128xf32, #tpu.memory_space<vmem>>, %arg11: memref<8x128xf32, #tpu.memory_space<vmem>>) attributes {dimension_semantics = [#tpu.dimension_semantics<parallel>], iteration_bounds = array<i64: 1>, scalar_prefetch = 0 : i64, scratch_operands = 0 : i64, tpu.core_type = #tpu.core_type<tc>, window_params = [{transform_indices = @transform_0, window_bounds = array<i64: 8, 64>}, {pipeline_mode = #tpu.pipeline_mode<synchronous>, transform_indices = @transform_1, window_bounds = array<i64: 64, 128>}, {pipeline_mode = #tpu.pipeline_mode<synchronous>, transform_indices = @transform_2, window_bounds = array<i64: 1, 128>}, {pipeline_mode = #tpu.pipeline_mode<synchronous>, transform_indices = @transform_3, window_bounds = array<i64: 128, 128>}, {pipeline_mode = #tpu.pipeline_mode<synchronous>, transform_indices = @transform_4, window_bounds = array<i64: 1, 128>}, {pipeline_mode = #tpu.pipeline_mode<synchronous>, transform_indices = @transform_5, window_bounds = array<i64: 128, 128>}, {pipeline_mode = #tpu.pipeline_mode<synchronous>, transform_indices = @transform_6, window_bounds = array<i64: 1, 128>}, {pipeline_mode = #tpu.pipeline_mode<synchronous>, transform_indices = @transform_7, window_bounds = array<i64: 128, 128>}, {pipeline_mode = #tpu.pipeline_mode<synchronous>, transform_indices = @transform_8, window_bounds = array<i64: 1, 128>}, {transform_indices = @transform_9, window_bounds = array<i64: 8, 128>}, {transform_indices = @transform_10, window_bounds = array<i64: 8, 128>}]} {
    %c0 = arith.constant 0 : index
    %c0_0 = arith.constant 0 : index
    %0 = vector.load %arg1[%c0, %c0_0] : memref<8x64xf32, #tpu.memory_space<vmem>>, vector<8x64xf32>
    %c0_1 = arith.constant 0 : index
    %c0_2 = arith.constant 0 : index
    %1 = vector.load %arg2[%c0_1, %c0_2] : memref<64x128xf32, #tpu.memory_space<vmem>>, vector<64x128xf32>
    %cst = arith.constant dense<0.000000e+00> : vector<8x128xf32>
    %2 = tpu.matmul %0, %1, %cst {dimension_numbers = #tpu.dot_dimension_numbers<[1], [0], [0], [1], [0, 0, 1, 1], [], []>} : vector<8x64xf32>, vector<64x128xf32>, vector<8x128xf32> -> vector<8x128xf32>
    %c0_3 = arith.constant 0 : index
    %c0_4 = arith.constant 0 : index
    %3 = vector.load %arg3[%c0_3, %c0_4] : memref<1x128xf32, #tpu.memory_space<vmem>>, vector<1x128xf32>
    %4 = vector.broadcast %3 : vector<1x128xf32> to vector<8x128xf32>
    %5 = arith.addf %2, %4 : vector<8x128xf32>
    %cst_5 = arith.constant 0.000000e+00 : f32
    %6 = vector.broadcast %cst_5 : f32 to vector<8x128xf32>
    %7 = arith.maximumf %5, %6 : vector<8x128xf32>
    %c0_6 = arith.constant 0 : index
    %c0_7 = arith.constant 0 : index
    %8 = vector.load %arg4[%c0_6, %c0_7] : memref<128x128xf32, #tpu.memory_space<vmem>>, vector<128x128xf32>
    %cst_8 = arith.constant dense<0.000000e+00> : vector<8x128xf32>
    %9 = tpu.matmul %7, %8, %cst_8 {dimension_numbers = #tpu.dot_dimension_numbers<[1], [0], [0], [1], [0, 0, 1, 1], [], []>} : vector<8x128xf32>, vector<128x128xf32>, vector<8x128xf32> -> vector<8x128xf32>
    %c0_9 = arith.constant 0 : index
    %c0_10 = arith.constant 0 : index
    %10 = vector.load %arg5[%c0_9, %c0_10] : memref<1x128xf32, #tpu.memory_space<vmem>>, vector<1x128xf32>
    %11 = vector.broadcast %10 : vector<1x128xf32> to vector<8x128xf32>
    %12 = arith.addf %9, %11 : vector<8x128xf32>
    %c0_11 = arith.constant 0 : index
    %c0_12 = arith.constant 0 : index
    %13 = vector.load %arg6[%c0_11, %c0_12] : memref<128x128xf32, #tpu.memory_space<vmem>>, vector<128x128xf32>
    %cst_13 = arith.constant dense<0.000000e+00> : vector<8x128xf32>
    %14 = tpu.matmul %12, %13, %cst_13 {dimension_numbers = #tpu.dot_dimension_numbers<[1], [0], [0], [1], [0, 0, 1, 1], [], []>} : vector<8x128xf32>, vector<128x128xf32>, vector<8x128xf32> -> vector<8x128xf32>
    %c0_14 = arith.constant 0 : index
    %c0_15 = arith.constant 0 : index
    %15 = vector.load %arg7[%c0_14, %c0_15] : memref<1x128xf32, #tpu.memory_space<vmem>>, vector<1x128xf32>
    %16 = vector.broadcast %15 : vector<1x128xf32> to vector<8x128xf32>
    %17 = arith.addf %14, %16 : vector<8x128xf32>
    %cst_16 = arith.constant 0.000000e+00 : f32
    %18 = vector.broadcast %cst_16 : f32 to vector<8x128xf32>
    %19 = arith.maximumf %17, %18 : vector<8x128xf32>
    %c0_17 = arith.constant 0 : index
    %c0_18 = arith.constant 0 : index
    %20 = vector.load %arg8[%c0_17, %c0_18] : memref<128x128xf32, #tpu.memory_space<vmem>>, vector<128x128xf32>
    %cst_19 = arith.constant dense<0.000000e+00> : vector<8x128xf32>
    %21 = tpu.matmul %19, %20, %cst_19 {dimension_numbers = #tpu.dot_dimension_numbers<[1], [0], [0], [1], [0, 0, 1, 1], [], []>} : vector<8x128xf32>, vector<128x128xf32>, vector<8x128xf32> -> vector<8x128xf32>
    %c0_20 = arith.constant 0 : index
    %c0_21 = arith.constant 0 : index
    %22 = vector.load %arg9[%c0_20, %c0_21] : memref<1x128xf32, #tpu.memory_space<vmem>>, vector<1x128xf32>
    %23 = vector.broadcast %22 : vector<1x128xf32> to vector<8x128xf32>
    %24 = arith.addf %21, %23 : vector<8x128xf32>
    %25 = math.absf %24 : vector<8x128xf32>
    %cst_22 = arith.constant 0.000000e+00 : f32
    %26 = vector.broadcast %cst_22 : f32 to vector<8x128xf32>
    %27 = arith.subf %26, %25 : vector<8x128xf32>
    %28 = math.exp %27 : vector<8x128xf32>
    %cst_23 = arith.constant 1.000000e+00 : f32
    %29 = vector.broadcast %cst_23 : f32 to vector<8x128xf32>
    %30 = arith.addf %29, %28 : vector<8x128xf32>
    %31 = tpu.reciprocal %30 : vector<8x128xf32> -> vector<8x128xf32>
    %cst_24 = arith.constant 0.000000e+00 : f32
    %32 = vector.broadcast %cst_24 : f32 to vector<8x128xf32>
    %33 = arith.cmpf oge, %24, %32 : vector<8x128xf32>
    %34 = arith.mulf %28, %31 : vector<8x128xf32>
    %35 = arith.select %33, %31, %34 : vector<8x128xi1>, vector<8x128xf32>
    %c0_25 = arith.constant 0 : index
    %c0_26 = arith.constant 0 : index
    %36 = vector.load %arg11[%c0_25, %c0_26] : memref<8x128xf32, #tpu.memory_space<vmem>>, vector<8x128xf32>
    tpu.vector_store %arg11[%c0_25, %c0_26], %12 {strides = array<i32>} : memref<8x128xf32, #tpu.memory_space<vmem>>, vector<8x128xf32>,
    %c0_27 = arith.constant 0 : index
    %c0_28 = arith.constant 0 : index
    %37 = vector.load %arg10[%c0_27, %c0_28] : memref<8x128xf32, #tpu.memory_space<vmem>>, vector<8x128xf32>
    tpu.vector_store %arg10[%c0_27, %c0_28], %35 {strides = array<i32>} : memref<8x128xf32, #tpu.memory_space<vmem>>, vector<8x128xf32>,
    return
  }
  func.func @transform_0(%arg0: i32) -> (i32, i32) {
    %c0_i32 = arith.constant 0 : i32
    %c0_i32_0 = arith.constant 0 : i32
    return %arg0, %c0_i32 : i32, i32
  }
  func.func @transform_1(%arg0: i32) -> (i32, i32) {
    %c0_i32 = arith.constant 0 : i32
    %c0_i32_0 = arith.constant 0 : i32
    %c0_i32_1 = arith.constant 0 : i32
    return %c0_i32, %c0_i32_0 : i32, i32
  }
  func.func @transform_2(%arg0: i32) -> (i32, i32) {
    %c0_i32 = arith.constant 0 : i32
    %c0_i32_0 = arith.constant 0 : i32
    %c0_i32_1 = arith.constant 0 : i32
    return %c0_i32, %c0_i32_0 : i32, i32
  }
  func.func @transform_3(%arg0: i32) -> (i32, i32) {
    %c0_i32 = arith.constant 0 : i32
    %c0_i32_0 = arith.constant 0 : i32
    %c0_i32_1 = arith.constant 0 : i32
    return %c0_i32, %c0_i32_0 : i32, i32
  }
  func.func @transform_4(%arg0: i32) -> (i32, i32) {
    %c0_i32 = arith.constant 0 : i32
    %c0_i32_0 = arith.constant 0 : i32
    %c0_i32_1 = arith.constant 0 : i32
    return %c0_i32, %c0_i32_0 : i32, i32
  }
  func.func @transform_5(%arg0: i32) -> (i32, i32) {
    %c0_i32 = arith.constant 0 : i32
    %c0_i32_0 = arith.constant 0 : i32
    %c0_i32_1 = arith.constant 0 : i32
    return %c0_i32, %c0_i32_0 : i32, i32
  }
  func.func @transform_6(%arg0: i32) -> (i32, i32) {
    %c0_i32 = arith.constant 0 : i32
    %c0_i32_0 = arith.constant 0 : i32
    %c0_i32_1 = arith.constant 0 : i32
    return %c0_i32, %c0_i32_0 : i32, i32
  }
  func.func @transform_7(%arg0: i32) -> (i32, i32) {
    %c0_i32 = arith.constant 0 : i32
    %c0_i32_0 = arith.constant 0 : i32
    %c0_i32_1 = arith.constant 0 : i32
    return %c0_i32, %c0_i32_0 : i32, i32
  }
  func.func @transform_8(%arg0: i32) -> (i32, i32) {
    %c0_i32 = arith.constant 0 : i32
    %c0_i32_0 = arith.constant 0 : i32
    %c0_i32_1 = arith.constant 0 : i32
    return %c0_i32, %c0_i32_0 : i32, i32
  }
  func.func @transform_9(%arg0: i32) -> (i32, i32) {
    %c0_i32 = arith.constant 0 : i32
    %c0_i32_0 = arith.constant 0 : i32
    return %arg0, %c0_i32 : i32, i32
  }
  func.func @transform_10(%arg0: i32) -> (i32, i32) {
    %c0_i32 = arith.constant 0 : i32
    %c0_i32_0 = arith.constant 0 : i32
    return %arg0, %c0_i32 : i32, i32
  }
}

</mosaic_0001>

<llo_original>
// kernel: tpu_custom_call.1
$region0: #{tpu_custom_call.1}
  #allocation0 [shape = 'u32[]', space=smem, size = 0x4, offset = 0x4, fixed_abs, tag = 'smem constant byte address 0x4 - core index']
  #allocation1 [shape = 'u32[144,128]{1,0:T(1,128)}', space=vmem, size = 0x12000, scoped, tag = 'internal scratch']
  %s0 = inlined_call_operand.hbm [shape: f32[8,64], index: 0, kind: input, shape index: {}]
  %s1 = inlined_call_operand.hbm [shape: f32[64,128], index: 1, kind: input, shape index: {}]
  %s2 = inlined_call_operand.vmem [shape: f32[1,128], index: 2, kind: input, shape index: {}]
  %s3 = inlined_call_operand.hbm [shape: f32[128,128], index: 3, kind: input, shape index: {}]
  %s4 = inlined_call_operand.vmem [shape: f32[1,128], index: 4, kind: input, shape index: {}]
  %s5 = inlined_call_operand.hbm [shape: f32[128,128], index: 5, kind: input, shape index: {}]
  %s6 = inlined_call_operand.vmem [shape: f32[1,128], index: 6, kind: input, shape index: {}]
  %s7 = inlined_call_operand.hbm [shape: f32[128,128], index: 7, kind: input, shape index: {}]
  %s8 = inlined_call_operand.vmem [shape: f32[1,128], index: 8, kind: input, shape index: {}]
  %s9 = inlined_call_operand.hbm [shape: f32[8,128], index: 9, kind: output, shape index: {0}]
  %s10 = inlined_call_operand.hbm [shape: f32[8,128], index: 10, kind: output, shape index: {1}]
  %11 = xla_tuple %s9, %s10
  %s12 = sld [smem:[#allocation0]]
  $region74: #{tpu_custom_call.1} parent=0
    _
  %s14 = ssub.s32 1, %s12
  %s15 = scalar_select 0, %s14, %s12
  $region1: #{tpu_custom_call.1} parent=0
    #allocation2 [shape = 'u8[4096]{0}', space=vmem, size = 0x1000, scoped, tag = 'input window, operand 0, single buffered']
    #allocation3 [shape = 's32[1]{0}', space=sflag, size = 0x4, scoped, tag = 'scoped memory for tpu_custom_call.1']
    #allocation4 [shape = 's32[1]{0}', space=sflag, size = 0x4, scoped, tag = 'scoped memory for tpu_custom_call.1']
    #allocation5 [shape = 'u8[32768]{0}', space=vmem, size = 0x8000, scoped, tag = 'input window, operand 1, single buffered']
    #allocation6 [shape = 's32[1]{0}', space=sflag, size = 0x4, scoped, tag = 'scoped memory for tpu_custom_call.1']
    #allocation7 [shape = 'u8[65536]{0}', space=vmem, size = 0x10000, scoped, tag = 'input window, operand 3, single buffered']
    #allocation8 [shape = 'u8[65536]{0}', space=vmem, size = 0x10000, scoped, tag = 'input window, operand 5, single buffered']
    #allocation9 [shape = 's32[1]{0}', space=sflag, size = 0x4, scoped, tag = 'scoped memory for tpu_custom_call.1']
    #allocation10 [shape = 'u8[65536]{0}', space=vmem, size = 0x10000, scoped, tag = 'input window, operand 7, single buffered']
    #allocation11 [shape = 'u8[4096]{0}', space=vmem, size = 0x1000, scoped, tag = 'output window, operand 0, single buffered']
    #allocation12 [shape = 'u8[4096]{0}', space=vmem, size = 0x1000, scoped, tag = 'output window, operand 1, single buffered']
    #allocation13 [shape = 's32[1]{0}', space=sflag, size = 0x4, scoped, tag = 'scoped memory for tpu_custom_call.1']
    %16 = vsyncpa [#allocation3], 0
    %17 = vsyncpa [#allocation6], 0
    %18 = vsyncpa [#allocation9], 0
    %19 = vsyncpa [#allocation4], 0
    %20 = vsyncpa [#allocation13], 0
    // Predicated region
    $region2: #{tpu_custom_call.1} parent=1 // pred_check
      _
    $region3: #{tpu_custom_call.1} parent=1 // pred_check_branch
      %22 = sbr.rel (0) target = $region5
    $region4: #{tpu_custom_call.1} parent=1 // pred_region
      %s24 = ssub.s32 128, 128
      %25 = vsyncadd [#allocation3], %s24
      %s27 = sshll.u32 [#allocation2], 4
      %s28 = int_to_ptr.vmem [resolvable:$true] %s27
      %30 = dma.hbm_to_vmem [thread:$0]  %s0, 128, %s28, [#allocation3]
    $region5: #{tpu_custom_call.1} parent=1 // pred_fallthru
      _
    // Predicated region
    $region6: #{tpu_custom_call.1} parent=1 // pred_check
      _
    $region7: #{tpu_custom_call.1} parent=1 // pred_check_branch
      %32 = sbr.rel (0) target = $region9
    $region8: #{tpu_custom_call.1} parent=1 // pred_region
      %s34 = ssub.s32 1024, 1024
      %35 = vsyncadd [#allocation6], %s34
      %s36 = sshll.u32 [#allocation5], 4
      %s37 = int_to_ptr.vmem [resolvable:$true] %s36
      %42 = dma.hbm_to_vmem [thread:$0]  %s1, 1024, %s37, [#allocation6], 128, 128, 8
    $region9: #{tpu_custom_call.1} parent=1 // pred_fallthru
      _
    // Predicated region
    $region10: #{tpu_custom_call.1} parent=1 // pred_check
      _
    $region11: #{tpu_custom_call.1} parent=1 // pred_check_branch
      %44 = sbr.rel (0) target = $region13
    $region12: #{tpu_custom_call.1} parent=1 // pred_region
      _
    $region13: #{tpu_custom_call.1} parent=1 // pred_fallthru
      _
    // Predicated region
    $region14: #{tpu_custom_call.1} parent=1 // pred_check
      _
    $region15: #{tpu_custom_call.1} parent=1 // pred_check_branch
      %46 = sbr.rel (0) target = $region17
    $region16: #{tpu_custom_call.1} parent=1 // pred_region
      %s48 = ssub.s32 2048, 2048
      %49 = vsyncadd [#allocation6], %s48
      %s50 = sshll.u32 [#allocation7], 4
      %s51 = int_to_ptr.vmem [resolvable:$true] %s50
      %56 = dma.hbm_to_vmem [thread:$0]  %s3, 2048, %s51, [#allocation6], 128, 128, 8
    $region17: #{tpu_custom_call.1} parent=1 // pred_fallthru
      _
    // Predicated region
    $region18: #{tpu_custom_call.1} parent=1 // pred_check
      _
    $region19: #{tpu_custom_call.1} parent=1 // pred_check_branch
      %58 = sbr.rel (0) target = $region21
    $region20: #{tpu_custom_call.1} parent=1 // pred_region
      _
    $region21: #{tpu_custom_call.1} parent=1 // pred_fallthru
      _
    // Predicated region
    $region22: #{tpu_custom_call.1} parent=1 // pred_check
      _
    $region23: #{tpu_custom_call.1} parent=1 // pred_check_branch
      %60 = sbr.rel (0) target = $region25
    $region24: #{tpu_custom_call.1} parent=1 // pred_region
      %s62 = ssub.s32 2048, 2048
      %63 = vsyncadd [#allocation9], %s62
      %s64 = sshll.u32 [#allocation8], 4
      %s65 = int_to_ptr.vmem [resolvable:$true] %s64
      %70 = dma.hbm_to_vmem [thread:$0]  %s5, 2048, %s65, [#allocation9], 128, 128, 8
    $region25: #{tpu_custom_call.1} parent=1 // pred_fallthru
      _
    // Predicated region
    $region26: #{tpu_custom_call.1} parent=1 // pred_check
      _
    $region27: #{tpu_custom_call.1} parent=1 // pred_check_branch
      %72 = sbr.rel (0) target = $region29
    $region28: #{tpu_custom_call.1} parent=1 // pred_region
      _
    $region29: #{tpu_custom_call.1} parent=1 // pred_fallthru
      _
    // Predicated region
    $region30: #{tpu_custom_call.1} parent=1 // pred_check
      _
    $region31: #{tpu_custom_call.1} parent=1 // pred_check_branch
      %74 = sbr.rel (0) target = $region33
    $region32: #{tpu_custom_call.1} parent=1 // pred_region
      %s76 = ssub.s32 2048, 2048
      %77 = vsyncadd [#allocation9], %s76
      %s78 = sshll.u32 [#allocation10], 4
      %s79 = int_to_ptr.vmem [resolvable:$true] %s78
      %84 = dma.hbm_to_vmem [thread:$0]  %s7, 2048, %s79, [#allocation9], 128, 128, 8
    $region33: #{tpu_custom_call.1} parent=1 // pred_fallthru
      _
    // Predicated region
    $region34: #{tpu_custom_call.1} parent=1 // pred_check
      _
    $region35: #{tpu_custom_call.1} parent=1 // pred_check_branch
      %86 = sbr.rel (0) target = $region37
    $region36: #{tpu_custom_call.1} parent=1 // pred_region
      _
    $region37: #{tpu_custom_call.1} parent=1 // pred_fallthru
      _
    // Predicated region
    $region38: #{tpu_custom_call.1} parent=1 // pred_check
      _
    $region39: #{tpu_custom_call.1} parent=1 // pred_check_branch
      %88 = sbr.rel (0) target = $region41
    $region40: #{tpu_custom_call.1} parent=1 // pred_region
      %89 = dma.done [#allocation3], 128
    $region41: #{tpu_custom_call.1} parent=1 // pred_fallthru
      _
    // Predicated region
    $region42: #{tpu_custom_call.1} parent=1 // pred_check
      _
    $region43: #{tpu_custom_call.1} parent=1 // pred_check_branch
      %91 = sbr.rel (0) target = $region45
    $region44: #{tpu_custom_call.1} parent=1 // pred_region
      %92 = dma.done [#allocation6], 1024
    $region45: #{tpu_custom_call.1} parent=1 // pred_fallthru
      _
    // Predicated region
    $region46: #{tpu_custom_call.1} parent=1 // pred_check
      _
    $region47: #{tpu_custom_call.1} parent=1 // pred_check_branch
      %94 = sbr.rel (0) target = $region49
    $region48: #{tpu_custom_call.1} parent=1 // pred_region
      %95 = dma.done [#allocation6], 2048
    $region49: #{tpu_custom_call.1} parent=1 // pred_fallthru
      _
    // Predicated region
    $region50: #{tpu_custom_call.1} parent=1 // pred_check
      _
    $region51: #{tpu_custom_call.1} parent=1 // pred_check_branch
      %97 = sbr.rel (0) target = $region53
    $region52: #{tpu_custom_call.1} parent=1 // pred_region
      %98 = dma.done [#allocation9], 2048
    $region53: #{tpu_custom_call.1} parent=1 // pred_fallthru
      _
    // Predicated region
    $region54: #{tpu_custom_call.1} parent=1 // pred_check
      _
    $region55: #{tpu_custom_call.1} parent=1 // pred_check_branch
      %100 = sbr.rel (0) target = $region57
    $region56: #{tpu_custom_call.1} parent=1 // pred_region
      %101 = dma.done [#allocation9], 2048
    $region57: #{tpu_custom_call.1} parent=1 // pred_fallthru
      _
    %v102 = vld [vmem:[#allocation2] sm:$0xff]
    %v103 = vld [vmem:[#allocation5] sm:$0xff]
    %v104 = vld [vmem:[#allocation5 + $0x8] sm:$0xff]
    %v105 = vld [vmem:[#allocation5 + $0x10] sm:$0xff]
    %v106 = vld [vmem:[#allocation5 + $0x18] sm:$0xff]
    %v107 = vld [vmem:[#allocation5 + $0x20] sm:$0xff]
    %v108 = vld [vmem:[#allocation5 + $0x28] sm:$0xff]
    %v109 = vld [vmem:[#allocation5 + $0x30] sm:$0xff]
    %v110 = vld [vmem:[#allocation5 + $0x38] sm:$0xff]
    %v111 = vld [vmem:[%s2] sm:$0x1]
    %v113 = vlaneseq
    %v114 = vshrl.u32 %v113, 7
    %v115 = vsub.s32 0, %v114
    %v116 = vrot.slane %v111, %v115
    %vm118 = vcmask 523264
    %v120 = vsel %vm118, %v102, 0
    %122 = vmatprep.subr.mxu0 0.0
    %123 = vmatpush1.msra.mxu0 %v103
    %124 = vmatprep.subr.mxu0 0.0
    %125 = vmatpush1.msra.mxu0 %v104
    %126 = vmatprep.subr.mxu0 0.0
    %127 = vmatpush1.msra.mxu0 %v105
    %128 = vmatprep.subr.mxu0 0.0
    %129 = vmatpush1.msra.mxu0 %v106
    %130 = vmatprep.subr.mxu0 0.0
    %131 = vmatpush1.msra.mxu0 %v107
    %132 = vmatprep.subr.mxu0 0.0
    %133 = vmatpush1.msra.mxu0 %v108
    %134 = vmatprep.subr.mxu0 0.0
    %135 = vmatpush1.msra.mxu0 %v109
    %136 = vmatprep.subr.mxu0 0.0
    %137 = vmatpush1.msra.mxu0 %v110
    %138 = vmatprep.subr.mxu0 0.0
    %139 = vmatpush1.msra.mxu0 0.0
    %140 = vmatprep.subr.mxu0 0.0
    %141 = vmatpush1.msra.mxu0 0.0
    %142 = vmatprep.subr.mxu0 0.0
    %143 = vmatpush1.msra.mxu0 0.0
    %144 = vmatprep.subr.mxu0 0.0
    %145 = vmatpush1.msra.mxu0 0.0
    %146 = vmatprep.subr.mxu0 0.0
    %147 = vmatpush1.msra.mxu0 0.0
    %148 = vmatprep.subr.mxu0 0.0
    %149 = vmatpush1.msra.mxu0 0.0
    %150 = vmatprep.subr.mxu0 0.0
    %151 = vmatpush1.msra.mxu0 0.0
    %152 = vmatprep.subr.mxu0 0.0
    %153 = vmatpush1.msra.mxu0 0.0
    %154 = vmatprep.subr.mxu0 0.0
    %155 = vmatpush1.msra.mxu0 0.0
    %156 = vmatprep.subr.mxu0 0.0
    %157 = vmatpush1.msra.mxu0 0.0
    %158 = vmatprep.subr.mxu0 0.0
    %159 = vmatpush1.msra.mxu0 0.0
    %160 = vmatprep.subr.mxu0 0.0
    %161 = vmatpush1.msra.mxu0 0.0
    %162 = vmatprep.subr.mxu0 0.0
    %163 = vmatpush1.msra.mxu0 0.0
    %164 = vmatprep.subr.mxu0 0.0
    %165 = vmatpush1.msra.mxu0 0.0
    %166 = vmatprep.subr.mxu0 0.0
    %167 = vmatpush1.msra.mxu0 0.0
    %168 = vmatprep.subr.mxu0 0.0
    %169 = vmatpush1.msra.mxu0 0.0
    %170 = vmatprep.subr.mxu0 0.0
    %171 = vmatpush1.msra.mxu0 0.0
    %172 = vmatprep.subr.mxu0 0.0
    %173 = vmatpush1.msra.mxu0 0.0
    %174 = vmatprep.subr.mxu0 0.0
    %175 = vmatpush1.msra.mxu0 0.0
    %176 = vmatprep.subr.mxu0 0.0
    %177 = vmatpush1.msra.mxu0 0.0
    %178 = vmatprep.subr.mxu0 0.0
    %179 = vmatpush1.msra.mxu0 0.0
    %180 = vmatprep.subr.mxu0 0.0
    %181 = vmatpush1.msra.mxu0 0.0
    %182 = vmatprep.subr.mxu0 0.0
    %183 = vmatpush1.msra.mxu0 0.0
    %184 = vmatprep.subr.mxu0 0.0
    %185 = vmatpush1.msra.mxu0 0.0
    %186 = vmatprep.mubr.f32.mxu0 0.0
    %187 = vmatmul.mubr.f32.gmra.mrb[0].mxu0 %v120
    %v188 = vpop.f32.mrb[0].mxu0
    %v189 = vadd.f32 %v116, %v188
    %v190 = vpop.f32.mrb[0].mxu0
    %191 = vdwg.mxu0
    %v192 = vmax.f32 %v189, 0.0
    %v193 = vld [vmem:[#allocation7] sm:$0xff]
    %v194 = vld [vmem:[#allocation7 + $0x8] sm:$0xff]
    %v195 = vld [vmem:[#allocation7 + $0x10] sm:$0xff]
    %v196 = vld [vmem:[#allocation7 + $0x18] sm:$0xff]
    %v197 = vld [vmem:[#allocation7 + $0x20] sm:$0xff]
    %v198 = vld [vmem:[#allocation7 + $0x28] sm:$0xff]
    %v199 = vld [vmem:[#allocation7 + $0x30] sm:$0xff]
    %v200 = vld [vmem:[#allocation7 + $0x38] sm:$0xff]
    %v201 = vld [vmem:[#allocation7 + $0x40] sm:$0xff]
    %v202 = vld [vmem:[#allocation7 + $0x48] sm:$0xff]
    %v203 = vld [vmem:[#allocation7 + $0x50] sm:$0xff]
    %v204 = vld [vmem:[#allocation7 + $0x58] sm:$0xff]
    %v205 = vld [vmem:[#allocation7 + $0x60] sm:$0xff]
    %v206 = vld [vmem:[#allocation7 + $0x68] sm:$0xff]
    %v207 = vld [vmem:[#allocation7 + $0x70] sm:$0xff]
    %v208 = vld [vmem:[#allocation7 + $0x78] sm:$0xff]
    %v209 = vld [vmem:[%s4] sm:$0x1]
    %v211 = vlaneseq
    %v212 = vshrl.u32 %v211, 7
    %v213 = vsub.s32 0, %v212
    %v214 = vrot.slane %v209, %v213
    %216 = vmatprep.subr.mxu0 0.0
    %217 = vmatpush1.msra.mxu0 %v193
    %218 = vmatprep.subr.mxu0 0.0
    %219 = vmatpush1.msra.mxu0 %v194
    %220 = vmatprep.subr.mxu0 0.0
    %221 = vmatpush1.msra.mxu0 %v195
    %222 = vmatprep.subr.mxu0 0.0
    %223 = vmatpush1.msra.mxu0 %v196
    %224 = vmatprep.subr.mxu0 0.0
    %225 = vmatpush1.msra.mxu0 %v197
    %226 = vmatprep.subr.mxu0 0.0
    %227 = vmatpush1.msra.mxu0 %v198
    %228 = vmatprep.subr.mxu0 0.0
    %229 = vmatpush1.msra.mxu0 %v199
    %230 = vmatprep.subr.mxu0 0.0
    %231 = vmatpush1.msra.mxu0 %v200
    %232 = vmatprep.subr.mxu0 0.0
    %233 = vmatpush1.msra.mxu0 %v201
    %234 = vmatprep.subr.mxu0 0.0
    %235 = vmatpush1.msra.mxu0 %v202
    %236 = vmatprep.subr.mxu0 0.0
    %237 = vmatpush1.msra.mxu0 %v203
    %238 = vmatprep.subr.mxu0 0.0
    %239 = vmatpush1.msra.mxu0 %v204
    %240 = vmatprep.subr.mxu0 0.0
    %241 = vmatpush1.msra.mxu0 %v205
    %242 = vmatprep.subr.mxu0 0.0
    %243 = vmatpush1.msra.mxu0 %v206
    %244 = vmatprep.subr.mxu0 0.0
    %245 = vmatpush1.msra.mxu0 %v207
    %246 = vmatprep.subr.mxu0 0.0
    %247 = vmatpush1.msra.mxu0 %v208
    %248 = vmatprep.subr.mxu0 0.0
    %249 = vmatpush1.msra.mxu0 0.0
    %250 = vmatprep.subr.mxu0 0.0
    %251 = vmatpush1.msra.mxu0 0.0
    %252 = vmatprep.subr.mxu0 0.0
    %253 = vmatpush1.msra.mxu0 0.0
    %254 = vmatprep.subr.mxu0 0.0
    %255 = vmatpush1.msra.mxu0 0.0
    %256 = vmatprep.subr.mxu0 0.0
    %257 = vmatpush1.msra.mxu0 0.0
    %258 = vmatprep.subr.mxu0 0.0
    %259 = vmatpush1.msra.mxu0 0.0
    %260 = vmatprep.subr.mxu0 0.0
    %261 = vmatpush1.msra.mxu0 0.0
    %262 = vmatprep.subr.mxu0 0.0
    %263 = vmatpush1.msra.mxu0 0.0
    %264 = vmatprep.subr.mxu0 0.0
    %265 = vmatpush1.msra.mxu0 0.0
    %266 = vmatprep.subr.mxu0 0.0
    %267 = vmatpush1.msra.mxu0 0.0
    %268 = vmatprep.subr.mxu0 0.0
    %269 = vmatpush1.msra.mxu0 0.0
    %270 = vmatprep.subr.mxu0 0.0
    %271 = vmatpush1.msra.mxu0 0.0
    %272 = vmatprep.subr.mxu0 0.0
    %273 = vmatpush1.msra.mxu0 0.0
    %274 = vmatprep.subr.mxu0 0.0
    %275 = vmatpush1.msra.mxu0 0.0
    %276 = vmatprep.subr.mxu0 0.0
    %277 = vmatpush1.msra.mxu0 0.0
    %278 = vmatprep.subr.mxu0 0.0
    %279 = vmatpush1.msra.mxu0 0.0
    %280 = vmatprep.mubr.f32.mxu0 0.0
    %281 = vmatmul.mubr.f32.gmra.mrb[0].mxu0 %v192
    %v282 = vpop.f32.mrb[0].mxu0
    %v283 = vadd.f32 %v214, %v282
    %v284 = vpop.f32.mrb[0].mxu0
    %285 = vdwg.mxu0
    %v286 = vld [vmem:[#allocation8] sm:$0xff]
    %v287 = vld [vmem:[#allocation8 + $0x8] sm:$0xff]
    %v288 = vld [vmem:[#allocation8 + $0x10] sm:$0xff]
    %v289 = vld [vmem:[#allocation8 + $0x18] sm:$0xff]
    %v290 = vld [vmem:[#allocation8 + $0x20] sm:$0xff]
    %v291 = vld [vmem:[#allocation8 + $0x28] sm:$0xff]
    %v292 = vld [vmem:[#allocation8 + $0x30] sm:$0xff]
    %v293 = vld [vmem:[#allocation8 + $0x38] sm:$0xff]
    %v294 = vld [vmem:[#allocation8 + $0x40] sm:$0xff]
    %v295 = vld [vmem:[#allocation8 + $0x48] sm:$0xff]
    %v296 = vld [vmem:[#allocation8 + $0x50] sm:$0xff]
    %v297 = vld [vmem:[#allocation8 + $0x58] sm:$0xff]
    %v298 = vld [vmem:[#allocation8 + $0x60] sm:$0xff]
    %v299 = vld [vmem:[#allocation8 + $0x68] sm:$0xff]
    %v300 = vld [vmem:[#allocation8 + $0x70] sm:$0xff]
    %v301 = vld [vmem:[#allocation8 + $0x78] sm:$0xff]
    %v302 = vld [vmem:[%s6] sm:$0x1]
    %v304 = vlaneseq
    %v305 = vshrl.u32 %v304, 7
    %v306 = vsub.s32 0, %v305
    %v307 = vrot.slane %v302, %v306
    %309 = vmatprep.subr.mxu0 0.0
    %310 = vmatpush1.msra.mxu0 %v286
    %311 = vmatprep.subr.mxu0 0.0
    %312 = vmatpush1.msra.mxu0 %v287
    %313 = vmatprep.subr.mxu0 0.0
    %314 = vmatpush1.msra.mxu0 %v288
    %315 = vmatprep.subr.mxu0 0.0
    %316 = vmatpush1.msra.mxu0 %v289
    %317 = vmatprep.subr.mxu0 0.0
    %318 = vmatpush1.msra.mxu0 %v290
    %319 = vmatprep.subr.mxu0 0.0
    %320 = vmatpush1.msra.mxu0 %v291
    %321 = vmatprep.subr.mxu0 0.0
    %322 = vmatpush1.msra.mxu0 %v292
    %323 = vmatprep.subr.mxu0 0.0
    %324 = vmatpush1.msra.mxu0 %v293
    %325 = vmatprep.subr.mxu0 0.0
    %326 = vmatpush1.msra.mxu0 %v294
    %327 = vmatprep.subr.mxu0 0.0
    %328 = vmatpush1.msra.mxu0 %v295
    %329 = vmatprep.subr.mxu0 0.0
    %330 = vmatpush1.msra.mxu0 %v296
    %331 = vmatprep.subr.mxu0 0.0
    %332 = vmatpush1.msra.mxu0 %v297
    %333 = vmatprep.subr.mxu0 0.0
    %334 = vmatpush1.msra.mxu0 %v298
    %335 = vmatprep.subr.mxu0 0.0
    %336 = vmatpush1.msra.mxu0 %v299
    %337 = vmatprep.subr.mxu0 0.0
    %338 = vmatpush1.msra.mxu0 %v300
    %339 = vmatprep.subr.mxu0 0.0
    %340 = vmatpush1.msra.mxu0 %v301
    %341 = vmatprep.subr.mxu0 0.0
    %342 = vmatpush1.msra.mxu0 0.0
    %343 = vmatprep.subr.mxu0 0.0
    %344 = vmatpush1.msra.mxu0 0.0
    %345 = vmatprep.subr.mxu0 0.0
    %346 = vmatpush1.msra.mxu0 0.0
    %347 = vmatprep.subr.mxu0 0.0
    %348 = vmatpush1.msra.mxu0 0.0
    %349 = vmatprep.subr.mxu0 0.0
    %350 = vmatpush1.msra.mxu0 0.0
    %351 = vmatprep.subr.mxu0 0.0
    %352 = vmatpush1.msra.mxu0 0.0
    %353 = vmatprep.subr.mxu0 0.0
    %354 = vmatpush1.msra.mxu0 0.0
    %355 = vmatprep.subr.mxu0 0.0
    %356 = vmatpush1.msra.mxu0 0.0
    %357 = vmatprep.subr.mxu0 0.0
    %358 = vmatpush1.msra.mxu0 0.0
    %359 = vmatprep.subr.mxu0 0.0
    %360 = vmatpush1.msra.mxu0 0.0
    %361 = vmatprep.subr.mxu0 0.0
    %362 = vmatpush1.msra.mxu0 0.0
    %363 = vmatprep.subr.mxu0 0.0
    %364 = vmatpush1.msra.mxu0 0.0
    %365 = vmatprep.subr.mxu0 0.0
    %366 = vmatpush1.msra.mxu0 0.0
    %367 = vmatprep.subr.mxu0 0.0
    %368 = vmatpush1.msra.mxu0 0.0
    %369 = vmatprep.subr.mxu0 0.0
    %370 = vmatpush1.msra.mxu0 0.0
    %371 = vmatprep.subr.mxu0 0.0
    %372 = vmatpush1.msra.mxu0 0.0
    %373 = vmatprep.mubr.f32.mxu0 0.0
    %374 = vmatmul.mubr.f32.gmra.mrb[0].mxu0 %v283
    %v375 = vpop.f32.mrb[0].mxu0
    %v376 = vadd.f32 %v307, %v375
    %v377 = vpop.f32.mrb[0].mxu0
    %378 = vdwg.mxu0
    %v379 = vmax.f32 %v376, 0.0
    %v380 = vld [vmem:[#allocation10] sm:$0xff]
    %v381 = vld [vmem:[#allocation10 + $0x8] sm:$0xff]
    %v382 = vld [vmem:[#allocation10 + $0x10] sm:$0xff]
    %v383 = vld [vmem:[#allocation10 + $0x18] sm:$0xff]
    %v384 = vld [vmem:[#allocation10 + $0x20] sm:$0xff]
    %v385 = vld [vmem:[#allocation10 + $0x28] sm:$0xff]
    %v386 = vld [vmem:[#allocation10 + $0x30] sm:$0xff]
    %v387 = vld [vmem:[#allocation10 + $0x38] sm:$0xff]
    %v388 = vld [vmem:[#allocation10 + $0x40] sm:$0xff]
    %v389 = vld [vmem:[#allocation10 + $0x48] sm:$0xff]
    %v390 = vld [vmem:[#allocation10 + $0x50] sm:$0xff]
    %v391 = vld [vmem:[#allocation10 + $0x58] sm:$0xff]
    %v392 = vld [vmem:[#allocation10 + $0x60] sm:$0xff]
    %v393 = vld [vmem:[#allocation10 + $0x68] sm:$0xff]
    %v394 = vld [vmem:[#allocation10 + $0x70] sm:$0xff]
    %v395 = vld [vmem:[#allocation10 + $0x78] sm:$0xff]
    %v396 = vld [vmem:[%s8] sm:$0x1]
    %v398 = vlaneseq
    %v399 = vshrl.u32 %v398, 7
    %v400 = vsub.s32 0, %v399
    %v401 = vrot.slane %v396, %v400
    %403 = vmatprep.subr.mxu0 0.0
    %404 = vmatpush1.msra.mxu0 %v380
    %405 = vmatprep.subr.mxu0 0.0
    %406 = vmatpush1.msra.mxu0 %v381
    %407 = vmatprep.subr.mxu0 0.0
    %408 = vmatpush1.msra.mxu0 %v382
    %409 = vmatprep.subr.mxu0 0.0
    %410 = vmatpush1.msra.mxu0 %v383
    %411 = vmatprep.subr.mxu0 0.0
    %412 = vmatpush1.msra.mxu0 %v384
    %413 = vmatprep.subr.mxu0 0.0
    %414 = vmatpush1.msra.mxu0 %v385
    %415 = vmatprep.subr.mxu0 0.0
    %416 = vmatpush1.msra.mxu0 %v386
    %417 = vmatprep.subr.mxu0 0.0
    %418 = vmatpush1.msra.mxu0 %v387
    %419 = vmatprep.subr.mxu0 0.0
    %420 = vmatpush1.msra.mxu0 %v388
    %421 = vmatprep.subr.mxu0 0.0
    %422 = vmatpush1.msra.mxu0 %v389
    %423 = vmatprep.subr.mxu0 0.0
    %424 = vmatpush1.msra.mxu0 %v390
    %425 = vmatprep.subr.mxu0 0.0
    %426 = vmatpush1.msra.mxu0 %v391
    %427 = vmatprep.subr.mxu0 0.0
    %428 = vmatpush1.msra.mxu0 %v392
    %429 = vmatprep.subr.mxu0 0.0
    %430 = vmatpush1.msra.mxu0 %v393
    %431 = vmatprep.subr.mxu0 0.0
    %432 = vmatpush1.msra.mxu0 %v394
    %433 = vmatprep.subr.mxu0 0.0
    %434 = vmatpush1.msra.mxu0 %v395
    %435 = vmatprep.subr.mxu0 0.0
    %436 = vmatpush1.msra.mxu0 0.0
    %437 = vmatprep.subr.mxu0 0.0
    %438 = vmatpush1.msra.mxu0 0.0
    %439 = vmatprep.subr.mxu0 0.0
    %440 = vmatpush1.msra.mxu0 0.0
    %441 = vmatprep.subr.mxu0 0.0
    %442 = vmatpush1.msra.mxu0 0.0
    %443 = vmatprep.subr.mxu0 0.0
    %444 = vmatpush1.msra.mxu0 0.0
    %445 = vmatprep.subr.mxu0 0.0
    %446 = vmatpush1.msra.mxu0 0.0
    %447 = vmatprep.subr.mxu0 0.0
    %448 = vmatpush1.msra.mxu0 0.0
    %449 = vmatprep.subr.mxu0 0.0
    %450 = vmatpush1.msra.mxu0 0.0
    %451 = vmatprep.subr.mxu0 0.0
    %452 = vmatpush1.msra.mxu0 0.0
    %453 = vmatprep.subr.mxu0 0.0
    %454 = vmatpush1.msra.mxu0 0.0
    %455 = vmatprep.subr.mxu0 0.0
    %456 = vmatpush1.msra.mxu0 0.0
    %457 = vmatprep.subr.mxu0 0.0
    %458 = vmatpush1.msra.mxu0 0.0
    %459 = vmatprep.subr.mxu0 0.0
    %460 = vmatpush1.msra.mxu0 0.0
    %461 = vmatprep.subr.mxu0 0.0
    %462 = vmatpush1.msra.mxu0 0.0
    %463 = vmatprep.subr.mxu0 0.0
    %464 = vmatpush1.msra.mxu0 0.0
    %465 = vmatprep.subr.mxu0 0.0
    %466 = vmatpush1.msra.mxu0 0.0
    %467 = vmatprep.mubr.f32.mxu0 0.0
    %468 = vmatmul.mubr.f32.gmra.mrb[0].mxu0 %v379
    %v469 = vpop.f32.mrb[0].mxu0
    %v470 = vadd.f32 %v401, %v469
    %v471 = vpop.f32.mrb[0].mxu0
    %472 = vdwg.mxu0
    %v473 = vand.u32 2147483647, %v470
    %v474 = vsub.f32 0.0, %v473
    %v475 = vmul.f32 %v474, 1.442695
    %v476 = vpow.pop %v475
    %v477 = vadd.f32 %v476, 1.0
    %v478 = vrcp.pop %v477
    %vm479 = vcmp.ge.f32.partialorder %v470, 0.0
    %v480 = vmul.f32 %v476, %v478
    %v481 = vsel %vm479, %v478, %v480
    %482 = vst [vmem:[#allocation12] sm:$0xff] %v283
    %483 = vst [vmem:[#allocation11] sm:$0xff] %v481
    // Predicated region
    $region58: #{tpu_custom_call.1} parent=1 // pred_check
      _
    $region59: #{tpu_custom_call.1} parent=1 // pred_check_branch
      %485 = sbr.rel (0) target = $region61
    $region60: #{tpu_custom_call.1} parent=1 // pred_region
      %s487 = ssub.s32 128, 128
      %488 = vsyncadd [#allocation4], %s487
      %s490 = sshll.u32 [#allocation11], 4
      %s491 = int_to_ptr.vmem [resolvable:$true] %s490
      %493 = dma.vmem_to_hbm [thread:$0]  %s491, 128, %s9, [#allocation4]
    $region61: #{tpu_custom_call.1} parent=1 // pred_fallthru
      _
    // Predicated region
    $region62: #{tpu_custom_call.1} parent=1 // pred_check
      _
    $region63: #{tpu_custom_call.1} parent=1 // pred_check_branch
      %495 = sbr.rel (0) target = $region65
    $region64: #{tpu_custom_call.1} parent=1 // pred_region
      %s497 = ssub.s32 128, 128
      %498 = vsyncadd [#allocation13], %s497
      %s500 = sshll.u32 [#allocation12], 4
      %s501 = int_to_ptr.vmem [resolvable:$true] %s500
      %503 = dma.vmem_to_hbm [thread:$0]  %s501, 128, %s10, [#allocation13]
    $region65: #{tpu_custom_call.1} parent=1 // pred_fallthru
      _
    // Predicated region
    $region66: #{tpu_custom_call.1} parent=1 // pred_check
      _
    $region67: #{tpu_custom_call.1} parent=1 // pred_check_branch
      %505 = sbr.rel (0) target = $region69
    $region68: #{tpu_custom_call.1} parent=1 // pred_region
      %506 = dma.done [#allocation4], 128
    $region69: #{tpu_custom_call.1} parent=1 // pred_fallthru
      _
    // Predicated region
    $region70: #{tpu_custom_call.1} parent=1 // pred_check
      _
    $region71: #{tpu_custom_call.1} parent=1 // pred_check_branch
      %508 = sbr.rel (0) target = $region73
    $region72: #{tpu_custom_call.1} parent=1 // pred_region
      %509 = dma.done [#allocation13], 128
    $region73: #{tpu_custom_call.1} parent=1 // pred_fallthru
      _
    %510 = vsyncpa [#allocation3], 1
    %511 = vsyncpa [#allocation6], 1
    %512 = vsyncpa [#allocation9], 1
    %513 = vsyncpa [#allocation4], 1
    %514 = vsyncpa [#allocation13], 1

</llo_original>
